<compile_context>
chip_gen: v7x
topology: tpu7x:2x2x1
jax: 0.10.0
libtpu: 0.0.40
codegen_flags: <defaults>
</compile_context>

<pallas_src>
import jax
import jax.numpy as jnp
import numpy as np
from jax.experimental import pallas as pl
from jax.experimental.pallas import tpu as pltpu


def _pick_row_tile(hw, bytes_per_row, vmem_budget=10 * 2**20):
    """Largest multiple-of-8 divisor of hw whose tile fits the VMEM budget."""
    cap = max(256, min(32768, vmem_budget // max(bytes_per_row, 1)))
    cap = (cap // 8) * 8
    if hw <= cap:
        return hw
    best = 0
    for d in range(8, cap + 1, 8):
        if hw % d == 0:
            best = d
    return best if best > 0 else hw


def _upscale_kernel(x_ref, w1_ref, b1_ref, w2_ref, b2_ref, o_ref):
    # x_ref : (TR, K)   bf16  im2col rows of the padded input (K = 9*Cin)
    # w1_ref: (K, F)    bf16  weight-normed 3x3 weights, flattened
    # b1_ref: (TR, F)   f32   untied bias rows for this row tile
    # w2_ref: (F, C2)   bf16  weight-normed 1x1 weights
    # b2_ref: (TR, C2)  f32
    # o_ref : (TR, C2)  f32   output tile (conv2 result, pre-pixel-shuffle)
    h = jnp.dot(x_ref[...], w1_ref[...], preferred_element_type=jnp.float32)
    h = h + b1_ref[...]
    h = jnp.maximum(h, 0.2 * h)                              # LeakyReLU(0.2), f32
    y = jnp.dot(h.astype(jnp.bfloat16), w2_ref[...],
                preferred_element_type=jnp.float32)
    o_ref[...] = y + b2_ref[...]


def upscale_net_pallas(x_nchw, params, upscale_factor=2):
    """Forward pass of UpscaleNet. Input/output are NCHW float32 (PyTorch layout)."""
    r = upscale_factor
    w1, g1, b1 = params["w1"], params["g1"], params["b1"]   # (F,Cin,3,3),(F,),(F,H,W)
    w2, g2, b2 = params["w2"], params["g2"], params["b2"]   # (C2,F,1,1),(C2,),(C2,H,W)

    N, Cin, H, W = x_nchw.shape
    F = w1.shape[0]
    C2 = w2.shape[0]
    Cout = C2 // (r * r)
    HW = H * W
    K = 9 * Cin

    # Weight normalization (GLOBAL norm, as in ca_code's Conv2dWNUB).
    w1_eff = w1 * g1[:, None, None, None] / jnp.sqrt(jnp.sum(w1 ** 2))
    w2_eff = w2 * g2[:, None, None, None] / jnp.sqrt(jnp.sum(w2 ** 2))

    # --- parameter re-layout (done once, outside the kernel) -------------------
    # (F, Cin, 3, 3) -> (ki, kj, Cin, F) -> (9*Cin, F) -> bf16
    w1_k = jnp.transpose(w1_eff, (2, 3, 1, 0)).reshape(K, F).astype(jnp.bfloat16)
    # (C2, F, 1, 1) -> (F, C2) -> bf16
    w2_k = jnp.transpose(w2_eff[:, :, 0, 0], (1, 0)).astype(jnp.bfloat16)
    # untied biases: (C, H, W) -> (H*W, C), f32, natural (unpadded) width
    b1_k = jnp.transpose(b1, (1, 2, 0)).reshape(HW, F).astype(jnp.float32)
    b2_k = jnp.transpose(b2, (1, 2, 0)).reshape(HW, C2).astype(jnp.float32)

    # --- im2col for the 3x3 / pad=1 conv (wrapper-side, ordering (ki,kj,cin)) --
    # TODO(synk): at production resolutions (H=W=1024) build the 3x3 halo taps
    # inside the kernel with manual DMA instead of a 9x im2col copy in HBM.
    x_nhwc = jnp.transpose(x_nchw, (0, 2, 3, 1))            # (N, H, W, Cin)
    x_pad = jnp.pad(x_nhwc, ((0, 0), (1, 1), (1, 1), (0, 0)))
    taps = [x_pad[:, ki:ki + H, kj:kj + W, :]
            for ki in range(3) for kj in range(3)]
    x_cols = jnp.concatenate(taps, axis=-1)                 # (N, H, W, 9*Cin)
    x_cols = x_cols.reshape(N * HW, K).astype(jnp.bfloat16)

    # --- grid: tile rows of the folded (N*H*W) axis ----------------------------
    # VMEM bytes per row (inputs + output, double-buffered) + rough temps.
    bytes_per_row = 2 * (2 * K + 4 * F + 4 * C2 + 4 * C2) + 4 * F + 8 * C2
    TR = _pick_row_tile(HW, bytes_per_row)                  # divides HW
    n_tiles = (N * HW) // TR
    bias_blocks = HW // TR                                  # bias repeats per batch

    y = pl.pallas_call(
        _upscale_kernel,
        out_shape=jax.ShapeDtypeStruct((N * HW, C2), jnp.float32),
        grid=(n_tiles,),
        in_specs=[
            pl.BlockSpec((TR, K), lambda t: (t, 0)),
            pl.BlockSpec((K, F), lambda t: (0, 0)),
            pl.BlockSpec((TR, F), lambda t: (t % bias_blocks, 0)),
            pl.BlockSpec((F, C2), lambda t: (0, 0)),
            pl.BlockSpec((TR, C2), lambda t: (t % bias_blocks, 0)),
        ],
        out_specs=pl.BlockSpec((TR, C2), lambda t: (t, 0)),
        compiler_params=pltpu.CompilerParams(
            dimension_semantics=("parallel",)),
    )(x_cols, w1_k, b1_k, w2_k, b2_k)

    # PixelShuffle (pure layout op, torch semantics):
    #   out[n, c, h*r+i, w*r+j] = conv_out[n, c*r*r + i*r + j, h, w]
    y = y.reshape(N, H, W, Cout, r, r)
    y = jnp.transpose(y, (0, 3, 1, 4, 2, 5))                # (N, C, H, r, W, r)
    return y.reshape(N, Cout, H * r, W * r)


def upscale_net_ref(x_nchw, params, upscale_factor=2):
    """Pure-JAX reference (lax.conv, HIGHEST precision) mirroring the PyTorch module."""
    r = upscale_factor
    w1, g1, b1 = params["w1"], params["g1"], params["b1"]
    w2, g2, b2 = params["w2"], params["g2"], params["b2"]
    w1e = w1 * g1[:, None, None, None] / jnp.sqrt(jnp.sum(w1 ** 2))
    w2e = w2 * g2[:, None, None, None] / jnp.sqrt(jnp.sum(w2 ** 2))
    h = jax.lax.conv_general_dilated(
        x_nchw, w1e, (1, 1), ((1, 1), (1, 1)),
        dimension_numbers=("NCHW", "OIHW", "NCHW"),
        precision=jax.lax.Precision.HIGHEST) + b1[None]
    h = jnp.where(h >= 0, h, 0.2 * h)
    y = jax.lax.conv_general_dilated(
        h, w2e, (1, 1), ((0, 0), (0, 0)),
        dimension_numbers=("NCHW", "OIHW", "NCHW"),
        precision=jax.lax.Precision.HIGHEST) + b2[None]
    N, C2, H, W = y.shape
    C = C2 // (r * r)
    y = y.reshape(N, C, r, r, H, W)
    y = jnp.transpose(y, (0, 1, 4, 2, 5, 3))
    return y.reshape(N, C, H * r, W * r)


if __name__ == "__main__":
    # Small, module-consistent shapes.
    N, Cin, size = 2, 4, 16          # batch, in_channels, spatial size
    n_ftrs, Cout, r = 8, 3, 2        # hidden channels, out_channels, upscale factor
    C2 = Cout * r * r

    key = jax.random.PRNGKey(0)
    k = jax.random.split(key, 7)
    x = jax.random.normal(k[0], (N, Cin, size, size), jnp.float32)
    params = {
        # conv_block: Conv2dWNUB(in_channels, n_ftrs, size, size, k=3, pad=1)
        "w1": 0.05 * jax.random.normal(k[1], (n_ftrs, Cin, 3, 3), jnp.float32),
        "g1": jnp.ones((n_ftrs,), jnp.float32)
              + 0.01 * jax.random.normal(k[2], (n_ftrs,), jnp.float32),
        "b1": 0.1 * jax.random.normal(k[3], (n_ftrs, size, size), jnp.float32),
        # out_block: Conv2dWNUB(n_ftrs, out*r^2, size, size, k=1, pad=0)
        "w2": 0.05 * jax.random.normal(k[4], (C2, n_ftrs, 1, 1), jnp.float32),
        "g2": jnp.ones((C2,), jnp.float32)
              + 0.01 * jax.random.normal(k[5], (C2,), jnp.float32),
        "b2": 0.1 * jax.random.normal(k[6], (C2, size, size), jnp.float32),
    }

    out = upscale_net_pallas(x, params, upscale_factor=r)
    out = jax.block_until_ready(out)
    assert out.shape == (N, Cout, size * r, size * r), out.shape

    ref = jax.block_until_ready(upscale_net_ref(x, params, upscale_factor=r))
    # bf16 MXU inputs vs HIGHEST-precision f32 reference -> ~1e-3 abs error here.
    np.testing.assert_allclose(np.asarray(out), np.asarray(ref),
                               rtol=2e-2, atol=2e-2)
    print("KERNEL_OK")
</pallas_src>

<mosaic_0001>
module attributes {stable_mosaic.version = 11 : i64} {
  func.func @_upscale_kernel(%arg0: i32, %arg1: memref<256x36xbf16, #tpu.memory_space<vmem>>, %arg2: memref<36x8xbf16, #tpu.memory_space<vmem>>, %arg3: memref<256x8xf32, #tpu.memory_space<vmem>>, %arg4: memref<8x12xbf16, #tpu.memory_space<vmem>>, %arg5: memref<256x12xf32, #tpu.memory_space<vmem>>, %arg6: memref<256x12xf32, #tpu.memory_space<vmem>>) attributes {dimension_semantics = [#tpu.dimension_semantics<parallel>], iteration_bounds = array<i64: 2>, scalar_prefetch = 0 : i64, scratch_operands = 0 : i64, tpu.core_type = #tpu.core_type<tc>, window_params = [{transform_indices = @transform_0, window_bounds = array<i64: 256, 36>}, {pipeline_mode = #tpu.pipeline_mode<synchronous>, transform_indices = @transform_1, window_bounds = array<i64: 36, 8>}, {transform_indices = @transform_2, window_bounds = array<i64: 256, 8>}, {pipeline_mode = #tpu.pipeline_mode<synchronous>, transform_indices = @transform_3, window_bounds = array<i64: 8, 12>}, {transform_indices = @transform_4, window_bounds = array<i64: 256, 12>}, {transform_indices = @transform_5, window_bounds = array<i64: 256, 12>}]} {
    %c0 = arith.constant 0 : index
    %c0_0 = arith.constant 0 : index
    %0 = vector.load %arg1[%c0, %c0_0] : memref<256x36xbf16, #tpu.memory_space<vmem>>, vector<256x36xbf16>
    %c0_1 = arith.constant 0 : index
    %c0_2 = arith.constant 0 : index
    %1 = vector.load %arg2[%c0_1, %c0_2] : memref<36x8xbf16, #tpu.memory_space<vmem>>, vector<36x8xbf16>
    %cst = arith.constant dense<0.000000e+00> : vector<256x8xf32>
    %2 = tpu.matmul %0, %1, %cst {dimension_numbers = #tpu.dot_dimension_numbers<[1], [0], [0], [1], [0, 0, 1, 1], [], []>} : vector<256x36xbf16>, vector<36x8xbf16>, vector<256x8xf32> -> vector<256x8xf32>
    %c0_3 = arith.constant 0 : index
    %c0_4 = arith.constant 0 : index
    %3 = vector.load %arg3[%c0_3, %c0_4] : memref<256x8xf32, #tpu.memory_space<vmem>>, vector<256x8xf32>
    %4 = arith.addf %2, %3 : vector<256x8xf32>
    %cst_5 = arith.constant 2.000000e-01 : f32
    %5 = vector.broadcast %cst_5 : f32 to vector<256x8xf32>
    %6 = arith.mulf %5, %4 : vector<256x8xf32>
    %7 = arith.maximumf %4, %6 : vector<256x8xf32>
    %8 = arith.truncf %7 : vector<256x8xf32> to vector<256x8xbf16>
    %c0_6 = arith.constant 0 : index
    %c0_7 = arith.constant 0 : index
    %9 = vector.load %arg4[%c0_6, %c0_7] : memref<8x12xbf16, #tpu.memory_space<vmem>>, vector<8x12xbf16>
    %cst_8 = arith.constant dense<0.000000e+00> : vector<256x12xf32>
    %10 = tpu.matmul %8, %9, %cst_8 {dimension_numbers = #tpu.dot_dimension_numbers<[1], [0], [0], [1], [0, 0, 1, 1], [], []>} : vector<256x8xbf16>, vector<8x12xbf16>, vector<256x12xf32> -> vector<256x12xf32>
    %c0_9 = arith.constant 0 : index
    %c0_10 = arith.constant 0 : index
    %11 = vector.load %arg5[%c0_9, %c0_10] : memref<256x12xf32, #tpu.memory_space<vmem>>, vector<256x12xf32>
    %12 = arith.addf %10, %11 : vector<256x12xf32>
    %c0_11 = arith.constant 0 : index
    %c0_12 = arith.constant 0 : index
    %13 = vector.load %arg6[%c0_11, %c0_12] : memref<256x12xf32, #tpu.memory_space<vmem>>, vector<256x12xf32>
    tpu.vector_store %arg6[%c0_11, %c0_12], %12 {strides = array<i32>} : memref<256x12xf32, #tpu.memory_space<vmem>>, vector<256x12xf32>,
    return
  }
  func.func @transform_0(%arg0: i32) -> (i32, i32) {
    %c0_i32 = arith.constant 0 : i32
    %c0_i32_0 = arith.constant 0 : i32
    return %arg0, %c0_i32 : i32, i32
  }
  func.func @transform_1(%arg0: i32) -> (i32, i32) {
    %c0_i32 = arith.constant 0 : i32
    %c0_i32_0 = arith.constant 0 : i32
    %c0_i32_1 = arith.constant 0 : i32
    return %c0_i32, %c0_i32_0 : i32, i32
  }
  func.func @transform_2(%arg0: i32) -> (i32, i32) {
    %c1_i32 = arith.constant 1 : i32
    %c0_i32 = arith.constant 0 : i32
    %0 = arith.cmpi eq, %c1_i32, %c0_i32 : i32
    %c1_i32_0 = arith.constant 1 : i32
    %1 = arith.select %0, %c1_i32_0, %c1_i32 : i32
    %2 = arith.remsi %arg0, %1 : i32
    %c0_i32_1 = arith.constant 0 : i32
    %3 = arith.cmpi ne, %2, %c0_i32_1 : i32
    %c0_i32_2 = arith.constant 0 : i32
    %4 = arith.cmpi slt, %2, %c0_i32_2 : i32
    %c0_i32_3 = arith.constant 0 : i32
    %5 = arith.cmpi slt, %1, %c0_i32_3 : i32
    %6 = arith.xori %4, %5 : i1
    %7 = arith.andi %6, %3 : i1
    %8 = arith.addi %2, %1 : i32
    %9 = arith.select %7, %8, %2 : i32
    %c0_i32_4 = arith.constant 0 : i32
    %c0_i32_5 = arith.constant 0 : i32
    return %9, %c0_i32_4 : i32, i32
  }
  func.func @transform_3(%arg0: i32) -> (i32, i32) {
    %c0_i32 = arith.constant 0 : i32
    %c0_i32_0 = arith.constant 0 : i32
    %c0_i32_1 = arith.constant 0 : i32
    return %c0_i32, %c0_i32_0 : i32, i32
  }
  func.func @transform_4(%arg0: i32) -> (i32, i32) {
    %c1_i32 = arith.constant 1 : i32
    %c0_i32 = arith.constant 0 : i32
    %0 = arith.cmpi eq, %c1_i32, %c0_i32 : i32
    %c1_i32_0 = arith.constant 1 : i32
    %1 = arith.select %0, %c1_i32_0, %c1_i32 : i32
    %2 = arith.remsi %arg0, %1 : i32
    %c0_i32_1 = arith.constant 0 : i32
    %3 = arith.cmpi ne, %2, %c0_i32_1 : i32
    %c0_i32_2 = arith.constant 0 : i32
    %4 = arith.cmpi slt, %2, %c0_i32_2 : i32
    %c0_i32_3 = arith.constant 0 : i32
    %5 = arith.cmpi slt, %1, %c0_i32_3 : i32
    %6 = arith.xori %4, %5 : i1
    %7 = arith.andi %6, %3 : i1
    %8 = arith.addi %2, %1 : i32
    %9 = arith.select %7, %8, %2 : i32
    %c0_i32_4 = arith.constant 0 : i32
    %c0_i32_5 = arith.constant 0 : i32
    return %9, %c0_i32_4 : i32, i32
  }
  func.func @transform_5(%arg0: i32) -> (i32, i32) {
    %c0_i32 = arith.constant 0 : i32
    %c0_i32_0 = arith.constant 0 : i32
    return %arg0, %c0_i32 : i32, i32
  }
}

</mosaic_0001>

<llo_original>
// kernel: tpu_custom_call.1
$region0: #{tpu_custom_call.1}
  #allocation0 [shape = 'u32[]', space=smem, size = 0x4, offset = 0x4, fixed_abs, tag = 'smem constant byte address 0x4 - core index']
  #allocation1 [shape = 'u32[144,128]{1,0:T(1,128)}', space=vmem, size = 0x12000, scoped, tag = 'internal scratch']
  %s0 = inlined_call_operand.vmem [shape: bf16[512,36], index: 0, kind: input, shape index: {}]
  %s1 = inlined_call_operand.vmem [shape: bf16[36,8], index: 1, kind: input, shape index: {}]
  %s2 = inlined_call_operand.vmem [shape: f32[256,8], index: 2, kind: input, shape index: {}]
  %s3 = inlined_call_operand.vmem [shape: bf16[8,12], index: 3, kind: input, shape index: {}]
  %s4 = inlined_call_operand.vmem [shape: f32[256,12], index: 4, kind: input, shape index: {}]
  %s5 = inlined_call_operand.vmem [shape: f32[512,12], index: 5, kind: output, shape index: {}]
  %s6 = sld [smem:[#allocation0]]
  $region53: #{tpu_custom_call.1} parent=0
    _
  %s8 = ssub.s32 1, %s6
  %s9 = scalar_select 0, %s8, %s6
  loop: start=0, step=1, limit=4
  $region2: #{tpu_custom_call.1} parent=0 // loop_pre_header
    _
  $region3: #{tpu_custom_call.1} parent=0 // loop_header
    %s11 = sphi 0, %s15
    %p12 = scmp.ge.s32.totalorder %s11, 4
    %s21 = sphi 0, %s23
    %s24 = sphi 0, %s21
    %s25 = sphi 0, %s24
    %s41 = sphi 0, %s25
    %s45 = sphi 0, %s45
    %s47 = sphi 0, %s45
    %s48 = sphi 0, %s47
    %s62 = sphi 0, %s48
    %s66 = sphi 0, %s66
    %s68 = sphi 0, %s66
    %s69 = sphi 0, %s68
    %s83 = sphi 0, %s69
    %s87 = sphi 0, %s87
    %s89 = sphi 0, %s87
    %s90 = sphi 0, %s89
    %s104 = sphi 0, %s90
    %s108 = sphi 0, %s108
    %s110 = sphi 0, %s108
    %s111 = sphi 0, %s110
    %s125 = sphi 0, %s111
    %s131 = sphi 0, %s133
    %s134 = sphi 0, %s131
    %s135 = sphi 0, %s134
    %s151 = sphi 0, %s135
  $region4: #{tpu_custom_call.1} parent=0 // loop_header_branch
    %14 = sbr.rel (%p12) target = $region8
  $region5: #{tpu_custom_call.1} parent=0 // loop_body
    %s16 = ssub.s32 %s11, 1
    %s17 = ssub.s32 %s11, 2
    %s18 = sadd.s32 %s11, 1
    %s19 = ssub.s32 %s11, %s18
    %p20 = scmp.eq.s32.totalorder %s19, 0
    %s22 = sadd.s32 %s21, 1
    %s23 = scalar_select %p20, %s21, %s22
    %p26 = pneg %p20
    %p27 = scmp.eq.s32.totalorder %s11, 1
    %p28 = por %p26, %p27
    %p29 = scmp.ne.s32.totalorder %s21, %s24
    %p30 = scmp.eq.s32.totalorder %s11, 0
    %p31 = por %p29, %p30
    %p32 = scmp.ne.s32.totalorder %s21, %s24
    %p33 = scmp.eq.s32.totalorder %s16, 1
    %p34 = por %p32, %p33
    %p35 = scmp.ne.s32.totalorder %s24, %s25
    %p36 = scmp.eq.s32.totalorder %s16, 0
    %p37 = por %p35, %p36
    %p38 = scmp.ne.s32.totalorder %s24, %s25
    %p39 = scmp.eq.s32.totalorder %s17, 1
    %p40 = por %p38, %p39
    %p42 = scmp.ne.s32.totalorder %s25, %s41
    %p43 = scmp.eq.s32.totalorder %s17, 0
    %p44 = por %p42, %p43
    %s46 = sadd.s32 %s45, 1
    %p49 = scmp.eq.s32.totalorder %s11, 1
    %p50 = scmp.ne.s32.totalorder %s45, %s47
    %p51 = scmp.eq.s32.totalorder %s11, 0
    %p52 = por %p50, %p51
    %p53 = scmp.ne.s32.totalorder %s45, %s47
    %p54 = scmp.eq.s32.totalorder %s16, 1
    %p55 = por %p53, %p54
    %p56 = scmp.ne.s32.totalorder %s47, %s48
    %p57 = scmp.eq.s32.totalorder %s16, 0
    %p58 = por %p56, %p57
    %p59 = scmp.ne.s32.totalorder %s47, %s48
    %p60 = scmp.eq.s32.totalorder %s17, 1
    %p61 = por %p59, %p60
    %p63 = scmp.ne.s32.totalorder %s48, %s62
    %p64 = scmp.eq.s32.totalorder %s17, 0
    %p65 = por %p63, %p64
    %s67 = sadd.s32 %s66, 1
    %p70 = scmp.eq.s32.totalorder %s11, 1
    %p71 = scmp.ne.s32.totalorder %s66, %s68
    %p72 = scmp.eq.s32.totalorder %s11, 0
    %p73 = por %p71, %p72
    %p74 = scmp.ne.s32.totalorder %s66, %s68
    %p75 = scmp.eq.s32.totalorder %s16, 1
    %p76 = por %p74, %p75
    %p77 = scmp.ne.s32.totalorder %s68, %s69
    %p78 = scmp.eq.s32.totalorder %s16, 0
    %p79 = por %p77, %p78
    %p80 = scmp.ne.s32.totalorder %s68, %s69
    %p81 = scmp.eq.s32.totalorder %s17, 1
    %p82 = por %p80, %p81
    %p84 = scmp.ne.s32.totalorder %s69, %s83
    %p85 = scmp.eq.s32.totalorder %s17, 0
    %p86 = por %p84, %p85
    %s88 = sadd.s32 %s87, 1
    %p91 = scmp.eq.s32.totalorder %s11, 1
    %p92 = scmp.ne.s32.totalorder %s87, %s89
    %p93 = scmp.eq.s32.totalorder %s11, 0
    %p94 = por %p92, %p93
    %p95 = scmp.ne.s32.totalorder %s87, %s89
    %p96 = scmp.eq.s32.totalorder %s16, 1
    %p97 = por %p95, %p96
    %p98 = scmp.ne.s32.totalorder %s89, %s90
    %p99 = scmp.eq.s32.totalorder %s16, 0
    %p100 = por %p98, %p99
    %p101 = scmp.ne.s32.totalorder %s89, %s90
    %p102 = scmp.eq.s32.totalorder %s17, 1
    %p103 = por %p101, %p102
    %p105 = scmp.ne.s32.totalorder %s90, %s104
    %p106 = scmp.eq.s32.totalorder %s17, 0
    %p107 = por %p105, %p106
    %s109 = sadd.s32 %s108, 1
    %p112 = scmp.eq.s32.totalorder %s11, 1
    %p113 = scmp.ne.s32.totalorder %s108, %s110
    %p114 = scmp.eq.s32.totalorder %s11, 0
    %p115 = por %p113, %p114
    %p116 = scmp.ne.s32.totalorder %s108, %s110
    %p117 = scmp.eq.s32.totalorder %s16, 1
    %p118 = por %p116, %p117
    %p119 = scmp.ne.s32.totalorder %s110, %s111
    %p120 = scmp.eq.s32.totalorder %s16, 0
    %p121 = por %p119, %p120
    %p122 = scmp.ne.s32.totalorder %s110, %s111
    %p123 = scmp.eq.s32.totalorder %s17, 1
    %p124 = por %p122, %p123
    %p126 = scmp.ne.s32.totalorder %s111, %s125
    %p127 = scmp.eq.s32.totalorder %s17, 0
    %p128 = por %p126, %p127
    %s129 = ssub.s32 %s11, %s18
    %p130 = scmp.eq.s32.totalorder %s129, 0
    %s132 = sadd.s32 %s131, 1
    %s133 = scalar_select %p130, %s131, %s132
    %p136 = pneg %p130
    %p137 = scmp.eq.s32.totalorder %s11, 1
    %p138 = por %p136, %p137
    %p139 = scmp.ne.s32.totalorder %s131, %s134
    %p140 = scmp.eq.s32.totalorder %s11, 0
    %p141 = por %p139, %p140
    %p142 = scmp.ne.s32.totalorder %s131, %s134
    %p143 = scmp.eq.s32.totalorder %s16, 1
    %p144 = por %p142, %p143
    %p145 = scmp.ne.s32.totalorder %s134, %s135
    %p146 = scmp.eq.s32.totalorder %s16, 0
    %p147 = por %p145, %p146
    %p148 = scmp.ne.s32.totalorder %s134, %s135
    %p149 = scmp.eq.s32.totalorder %s17, 1
    %p150 = por %p148, %p149
    %p152 = scmp.ne.s32.totalorder %s135, %s151
    %p153 = scmp.eq.s32.totalorder %s17, 0
    %p154 = por %p152, %p153
    %p155 = scmp.le.s32.totalorder 1, %s11
    %p156 = scmp.lt.s32.totalorder %s11, 3
    %p157 = pnand %p155, %p156
    %p158 = pneg %p157
    // Predicated region
    $region9: #{tpu_custom_call.1} parent=5 // pred_check
      _
    $region10: #{tpu_custom_call.1} parent=5 // pred_check_branch
      %160 = sbr.rel (%p157) target = $region12
    $region11: #{tpu_custom_call.1} parent=5 // pred_region
      %s161 = ssub.s32 %s11, 1
      // Predicated region
      $region13: #{tpu_custom_call.1} parent=11 // pred_check
        %p162 = pneg %p58
      $region14: #{tpu_custom_call.1} parent=11 // pred_check_branch
        %164 = sbr.rel (%p162) target = $region16
      $region15: #{tpu_custom_call.1} parent=11 // pred_region
        _
      $region16: #{tpu_custom_call.1} parent=11 // pred_fallthru
        _
      // Predicated region
      $region17: #{tpu_custom_call.1} parent=11 // pred_check
        %p165 = pneg %p79
      $region18: #{tpu_custom_call.1} parent=11 // pred_check_branch
        %167 = sbr.rel (%p165) target = $region20
      $region19: #{tpu_custom_call.1} parent=11 // pred_region
        _
      $region20: #{tpu_custom_call.1} parent=11 // pred_fallthru
        _
      // Predicated region
      $region21: #{tpu_custom_call.1} parent=11 // pred_check
        %p168 = pneg %p100
      $region22: #{tpu_custom_call.1} parent=11 // pred_check_branch
        %170 = sbr.rel (%p168) target = $region24
      $region23: #{tpu_custom_call.1} parent=11 // pred_region
        _
      $region24: #{tpu_custom_call.1} parent=11 // pred_fallthru
        _
      // Predicated region
      $region25: #{tpu_custom_call.1} parent=11 // pred_check
        %p171 = pneg %p121
      $region26: #{tpu_custom_call.1} parent=11 // pred_check_branch
        %173 = sbr.rel (%p171) target = $region28
      $region27: #{tpu_custom_call.1} parent=11 // pred_region
        _
      $region28: #{tpu_custom_call.1} parent=11 // pred_fallthru
        _
    $region12: #{tpu_custom_call.1} parent=5 // pred_fallthru
      _
    %p174 = scmp.lt.s32.totalorder %s11, 2
    // Predicated region
    $region29: #{tpu_custom_call.1} parent=5 // pred_check
      %p175 = pneg %p174
    $region30: #{tpu_custom_call.1} parent=5 // pred_check_branch
      %177 = sbr.rel (%p175) target = $region32
    $region31: #{tpu_custom_call.1} parent=5 // pred_region
      // Predicated region
      $region33: #{tpu_custom_call.1} parent=31 // pred_check
        %p178 = pneg %p31
      $region34: #{tpu_custom_call.1} parent=31 // pred_check_branch
        %180 = sbr.rel (%p178) target = $region36
      $region35: #{tpu_custom_call.1} parent=31 // pred_region
        %s181 = smul.u32 32, %s11
        %p182 = scmp.lt.s32.totalorder %s181, 63
        %s183 = scalar_select %p182, %s181, 63
        %s184 = smul.addr %s183, 4
        %s185 = scalar_lea.vmem %s0, %s184
        %s186 = smul.u32 32, %s11
      $region36: #{tpu_custom_call.1} parent=31 // pred_fallthru
        _
    $region32: #{tpu_custom_call.1} parent=5 // pred_fallthru
      _
    %p187 = scmp.le.s32.totalorder 1, %s11
    %p188 = scmp.lt.s32.totalorder %s11, 3
    %p189 = pnand %p187, %p188
    %p190 = pneg %p189
    // Predicated region
    $region37: #{tpu_custom_call.1} parent=5 // pred_check
      _
    $region38: #{tpu_custom_call.1} parent=5 // pred_check_branch
      %192 = sbr.rel (%p189) target = $region40
    $region39: #{tpu_custom_call.1} parent=5 // pred_region
      %s193 = ssub.s32 %s11, 1
      %s194 = smul.u32 32, %s16
      %p195 = scmp.lt.s32.totalorder %s194, 63
      %s196 = scalar_select %p195, %s194, 63
      %s197 = smul.addr %s196, 4
      %s198 = scalar_lea.vmem %s0, %s197
      %p199 = pneg %p37
      %p200 = pneg %p34
      %p201 = pneg %p58
      %p202 = pneg %p55
      %p203 = pneg %p79
      %p204 = pneg %p76
      %p205 = pneg %p100
      %p206 = pneg %p97
      %p207 = pneg %p121
      %p208 = pneg %p118
      %p209 = pneg %p147
      %p210 = pneg %p144
      %s211 = smul.u32 32, %s16
      %p212 = scmp.lt.s32.totalorder %s211, 63
      %s213 = scalar_select %p212, %s211, 63
      %s214 = smul.addr %s213, 8
      %s215 = scalar_lea.vmem %s5, %s214
      %s216 = smul.u32 32, %s16
      %p217 = scmp.lt.s32.totalorder %s216, 63
      %s218 = scalar_select %p217, %s216, 63
      %s219 = smul.addr %s218, 4
      %s220 = scalar_lea.vmem %s0, %s219
      %s221 = smul.u32 32, %s16
      %s222 = smul.u32 32, %s16
      %p223 = scmp.lt.s32.totalorder %s222, 63
      %s224 = scalar_select %p223, %s222, 63
      %s225 = smul.addr %s224, 8
      %s226 = scalar_lea.vmem %s5, %s225
      %s227 = smul.u32 32, %s16
      %v229 = vld [vmem:[%s220] sm:$0xf]
      %v230 = vld [vmem:[%s220 + $0x4] sm:$0xf]
      %v231 = vld [vmem:[%s220 + $0x8] sm:$0xf]
      %v232 = vld [vmem:[%s220 + $0xc] sm:$0xf]
      %v233 = vld [vmem:[%s220 + $0x10] sm:$0xf]
      %v234 = vld [vmem:[%s220 + $0x14] sm:$0xf]
      %v235 = vld [vmem:[%s220 + $0x18] sm:$0xf]
      %v236 = vld [vmem:[%s220 + $0x1c] sm:$0xf]
      %v237 = vld [vmem:[%s220 + $0x20] sm:$0xf]
      %v238 = vld [vmem:[%s220 + $0x24] sm:$0xf]
      %v239 = vld [vmem:[%s220 + $0x28] sm:$0xf]
      %v240 = vld [vmem:[%s220 + $0x2c] sm:$0xf]
      %v241 = vld [vmem:[%s220 + $0x30] sm:$0xf]
      %v242 = vld [vmem:[%s220 + $0x34] sm:$0xf]
      %v243 = vld [vmem:[%s220 + $0x38] sm:$0xf]
      %v244 = vld [vmem:[%s220 + $0x3c] sm:$0xf]
      %v245 = vld [vmem:[%s220 + $0x40] sm:$0xf]
      %v246 = vld [vmem:[%s220 + $0x44] sm:$0xf]
      %v247 = vld [vmem:[%s220 + $0x48] sm:$0xf]
      %v248 = vld [vmem:[%s220 + $0x4c] sm:$0xf]
      %v249 = vld [vmem:[%s220 + $0x50] sm:$0xf]
      %v250 = vld [vmem:[%s220 + $0x54] sm:$0xf]
      %v251 = vld [vmem:[%s220 + $0x58] sm:$0xf]
      %v252 = vld [vmem:[%s220 + $0x5c] sm:$0xf]
      %v253 = vld [vmem:[%s220 + $0x60] sm:$0xf]
      %v254 = vld [vmem:[%s220 + $0x64] sm:$0xf]
      %v255 = vld [vmem:[%s220 + $0x68] sm:$0xf]
      %v256 = vld [vmem:[%s220 + $0x6c] sm:$0xf]
      %v257 = vld [vmem:[%s220 + $0x70] sm:$0xf]
      %v258 = vld [vmem:[%s220 + $0x74] sm:$0xf]
      %v259 = vld [vmem:[%s220 + $0x78] sm:$0xf]
      %v260 = vld [vmem:[%s220 + $0x7c] sm:$0xf]
      %v261 = vld [vmem:[%s1] sm:$0xf]
      %v262 = vld [vmem:[%s1 + $0x4] sm:$0xf]
      %v263 = vld [vmem:[%s1 + $0x8] sm:$0xf]
      %v264 = vld [vmem:[%s1 + $0xc] sm:$0xf]
      %v265 = vld [vmem:[%s1 + $0x10] sm:$0x3]
      %v266 = vld [vmem:[%s2] sm:$0xff]
      %v267 = vld [vmem:[%s2 + $0x8] sm:$0xff]
      %v268 = vld [vmem:[%s2 + $0x10] sm:$0xff]
      %v269 = vld [vmem:[%s2 + $0x18] sm:$0xff]
      %v270 = vld [vmem:[%s2 + $0x20] sm:$0xff]
      %v271 = vld [vmem:[%s2 + $0x28] sm:$0xff]
      %v272 = vld [vmem:[%s2 + $0x30] sm:$0xff]
      %v273 = vld [vmem:[%s2 + $0x38] sm:$0xff]
      %v274 = vld [vmem:[%s2 + $0x40] sm:$0xff]
      %v275 = vld [vmem:[%s2 + $0x48] sm:$0xff]
      %v276 = vld [vmem:[%s2 + $0x50] sm:$0xff]
      %v277 = vld [vmem:[%s2 + $0x58] sm:$0xff]
      %v278 = vld [vmem:[%s2 + $0x60] sm:$0xff]
      %v279 = vld [vmem:[%s2 + $0x68] sm:$0xff]
      %v280 = vld [vmem:[%s2 + $0x70] sm:$0xff]
      %v281 = vld [vmem:[%s2 + $0x78] sm:$0xff]
      %v282 = vld [vmem:[%s2 + $0x80] sm:$0xff]
      %v283 = vld [vmem:[%s2 + $0x88] sm:$0xff]
      %v284 = vld [vmem:[%s2 + $0x90] sm:$0xff]
      %v285 = vld [vmem:[%s2 + $0x98] sm:$0xff]
      %v286 = vld [vmem:[%s2 + $0xa0] sm:$0xff]
      %v287 = vld [vmem:[%s2 + $0xa8] sm:$0xff]
      %v288 = vld [vmem:[%s2 + $0xb0] sm:$0xff]
      %v289 = vld [vmem:[%s2 + $0xb8] sm:$0xff]
      %v290 = vld [vmem:[%s2 + $0xc0] sm:$0xff]
      %v291 = vld [vmem:[%s2 + $0xc8] sm:$0xff]
      %v292 = vld [vmem:[%s2 + $0xd0] sm:$0xff]
      %v293 = vld [vmem:[%s2 + $0xd8] sm:$0xff]
      %v294 = vld [vmem:[%s2 + $0xe0] sm:$0xff]
      %v295 = vld [vmem:[%s2 + $0xe8] sm:$0xff]
      %v296 = vld [vmem:[%s2 + $0xf0] sm:$0xff]
      %v297 = vld [vmem:[%s2 + $0xf8] sm:$0xff]
      %v330 = vunpack.c.l.b16 %v229
      %v331 = vunpack.c.l.b16 %v230
      %v332 = vunpack.c.l.b16 %v231
      %v333 = vunpack.c.l.b16 %v232
      %v334 = vunpack.c.l.b16 %v233
      %v335 = vunpack.c.l.b16 %v234
      %v336 = vunpack.c.l.b16 %v235
      %v337 = vunpack.c.l.b16 %v236
      %v338 = vunpack.c.l.b16 %v237
      %v339 = vunpack.c.l.b16 %v238
      %v340 = vunpack.c.l.b16 %v239
      %v341 = vunpack.c.l.b16 %v240
      %v342 = vunpack.c.l.b16 %v241
      %v343 = vunpack.c.l.b16 %v242
      %v344 = vunpack.c.l.b16 %v243
      %v345 = vunpack.c.l.b16 %v244
      %v346 = vunpack.c.l.b16 %v245
      %v347 = vunpack.c.l.b16 %v246
      %v348 = vunpack.c.l.b16 %v247
      %v349 = vunpack.c.l.b16 %v248
      %v350 = vunpack.c.l.b16 %v249
      %v351 = vunpack.c.l.b16 %v250
      %v352 = vunpack.c.l.b16 %v251
      %v353 = vunpack.c.l.b16 %v252
      %v354 = vunpack.c.l.b16 %v253
      %v355 = vunpack.c.l.b16 %v254
      %v356 = vunpack.c.l.b16 %v255
      %v357 = vunpack.c.l.b16 %v256
      %v358 = vunpack.c.l.b16 %v257
      %v359 = vunpack.c.l.b16 %v258
      %v360 = vunpack.c.l.b16 %v259
      %v361 = vunpack.c.l.b16 %v260
      %v362 = vpack.c.b16 %v331, %v330
      %v363 = vpack.c.b16 %v333, %v332
      %v364 = vpack.c.b16 %v335, %v334
      %v365 = vpack.c.b16 %v337, %v336
      %v366 = vpack.c.b16 %v339, %v338
      %v367 = vpack.c.b16 %v341, %v340
      %v368 = vpack.c.b16 %v343, %v342
      %v369 = vpack.c.b16 %v345, %v344
      %v370 = vpack.c.b16 %v347, %v346
      %v371 = vpack.c.b16 %v349, %v348
      %v372 = vpack.c.b16 %v351, %v350
      %v373 = vpack.c.b16 %v353, %v352
      %v374 = vpack.c.b16 %v355, %v354
      %v375 = vpack.c.b16 %v357, %v356
      %v376 = vpack.c.b16 %v359, %v358
      %v377 = vpack.c.b16 %v361, %v360
      %v383 = vunpack.c.l.b16 %v261
      %v384 = vunpack.c.l.b16 %v262
      %v385 = vunpack.c.l.b16 %v263
      %v386 = vunpack.c.l.b16 %v264
      %v387 = vunpack.c.l.b16 %v265
      %v388 = vpack.c.b16 %v384, %v383
      %v389 = vpack.c.b16 %v386, %v385
      %v390 = vpack.c.b16 %v387, %v387
      %vm393 = vcmask 293888
      %v395 = vsel %vm393, %v362, 0
      %v398 = vsel %vm393, %v363, 0
      %v401 = vsel %vm393, %v364, 0
      %v404 = vsel %vm393, %v365, 0
      %v407 = vsel %vm393, %v366, 0
      %v410 = vsel %vm393, %v367, 0
      %v413 = vsel %vm393, %v368, 0
      %v416 = vsel %vm393, %v369, 0
      %v419 = vsel %vm393, %v370, 0
      %v422 = vsel %vm393, %v371, 0
      %v425 = vsel %vm393, %v372, 0
      %v428 = vsel %vm393, %v373, 0
      %v431 = vsel %vm393, %v374, 0
      %v434 = vsel %vm393, %v375, 0
      %v437 = vsel %vm393, %v376, 0
      %v440 = vsel %vm393, %v377, 0
      %vm442 = vcmask 1041408
      %v444 = vsel %vm442, %v390, 0
      %446 = vmatprep.subr.bf16.mxu0 0
      %447 = vmatpush1.bf16.msra.mxu0 %v388
      %448 = vmatprep.subr.bf16.mxu0 0
      %449 = vmatpush1.bf16.msra.mxu0 %v389
      %450 = vmatprep.subr.bf16.mxu0 0
      %451 = vmatpush1.bf16.msra.mxu0 %v444
      %452 = vmatprep.subr.bf16.mxu0 0
      %453 = vmatpush1.bf16.msra.mxu0 0
      %454 = vmatprep.subr.bf16.mxu0 0
      %455 = vmatpush1.bf16.msra.mxu0 0
      %456 = vmatprep.subr.bf16.mxu0 0
      %457 = vmatpush1.bf16.msra.mxu0 0
      %458 = vmatprep.subr.bf16.mxu0 0
      %459 = vmatpush1.bf16.msra.mxu0 0
      %460 = vmatprep.subr.bf16.mxu0 0
      %461 = vmatpush1.bf16.msra.mxu0 0
      %462 = vmatprep.subr.bf16.mxu0 0
      %463 = vmatpush1.bf16.msra.mxu0 0
      %464 = vmatprep.subr.bf16.mxu0 0
      %465 = vmatpush1.bf16.msra.mxu0 0
      %466 = vmatprep.subr.bf16.mxu0 0
      %467 = vmatpush1.bf16.msra.mxu0 0
      %468 = vmatprep.subr.bf16.mxu0 0
      %469 = vmatpush1.bf16.msra.mxu0 0
      %470 = vmatprep.subr.bf16.mxu0 0
      %471 = vmatpush1.bf16.msra.mxu0 0
      %472 = vmatprep.subr.bf16.mxu0 0
      %473 = vmatpush1.bf16.msra.mxu0 0
      %474 = vmatprep.subr.bf16.mxu0 0
      %475 = vmatpush1.bf16.msra.mxu0 0
      %476 = vmatprep.subr.bf16.mxu0 0
      %477 = vmatpush1.bf16.msra.mxu0 0
      %478 = vmatprep.mubr.bf16.mxu0 0
      %479 = vmatmul.mubr.bf16.gmra.mrb[0].mxu0 %v395
      %v480 = vpop.f32.mrb[0].mxu0
      %v481 = vadd.f32 %v266, %v480
      %v482 = vpop.f32.mrb[0].mxu0
      %v483 = vpop.f32.mrb[0].mxu0
      %v484 = vadd.f32 %v267, %v483
      %v485 = vpop.f32.mrb[0].mxu0
      %486 = vmatprep.mubr.bf16.mxu0 0
      %487 = vmatmul.mubr.bf16.gmra.mrb[0].mxu0 %v398
      %v488 = vpop.f32.mrb[0].mxu0
      %v489 = vadd.f32 %v268, %v488
      %v490 = vpop.f32.mrb[0].mxu0
      %v491 = vpop.f32.mrb[0].mxu0
      %v492 = vadd.f32 %v269, %v491
      %v493 = vpop.f32.mrb[0].mxu0
      %494 = vmatprep.mubr.bf16.mxu0 0
      %495 = vmatmul.mubr.bf16.gmra.mrb[0].mxu0 %v401
      %v496 = vpop.f32.mrb[0].mxu0
      %v497 = vadd.f32 %v270, %v496
      %v498 = vpop.f32.mrb[0].mxu0
      %v499 = vpop.f32.mrb[0].mxu0
      %v500 = vadd.f32 %v271, %v499
      %v501 = vpop.f32.mrb[0].mxu0
      %502 = vmatprep.mubr.bf16.mxu0 0
      %503 = vmatmul.mubr.bf16.gmra.mrb[0].mxu0 %v404
      %v504 = vpop.f32.mrb[0].mxu0
      %v505 = vadd.f32 %v272, %v504
      %v506 = vpop.f32.mrb[0].mxu0
      %v507 = vpop.f32.mrb[0].mxu0
      %v508 = vadd.f32 %v273, %v507
      %v509 = vpop.f32.mrb[0].mxu0
      %510 = vmatprep.mubr.bf16.mxu0 0
      %511 = vmatmul.mubr.bf16.gmra.mrb[0].mxu0 %v407
      %v512 = vpop.f32.mrb[0].mxu0
      %v513 = vadd.f32 %v274, %v512
      %v514 = vpop.f32.mrb[0].mxu0
      %v515 = vpop.f32.mrb[0].mxu0
      %v516 = vadd.f32 %v275, %v515
      %v517 = vpop.f32.mrb[0].mxu0
      %518 = vmatprep.mubr.bf16.mxu0 0
      %519 = vmatmul.mubr.bf16.gmra.mrb[0].mxu0 %v410
      %v520 = vpop.f32.mrb[0].mxu0
      %v521 = vadd.f32 %v276, %v520
      %v522 = vpop.f32.mrb[0].mxu0
      %v523 = vpop.f32.mrb[0].mxu0
      %v524 = vadd.f32 %v277, %v523
      %v525 = vpop.f32.mrb[0].mxu0
      %526 = vmatprep.mubr.bf16.mxu0 0
      %527 = vmatmul.mubr.bf16.gmra.mrb[0].mxu0 %v413
      %v528 = vpop.f32.mrb[0].mxu0
      %v529 = vadd.f32 %v278, %v528
      %v530 = vpop.f32.mrb[0].mxu0
      %v531 = vpop.f32.mrb[0].mxu0
      %v532 = vadd.f32 %v279, %v531
      %v533 = vpop.f32.mrb[0].mxu0
      %534 = vmatprep.mubr.bf16.mxu0 0
      %535 = vmatmul.mubr.bf16.gmra.mrb[0].mxu0 %v416
      %v536 = vpop.f32.mrb[0].mxu0
      %v537 = vadd.f32 %v280, %v536
      %v538 = vpop.f32.mrb[0].mxu0
      %v539 = vpop.f32.mrb[0].mxu0
      %v540 = vadd.f32 %v281, %v539
      %v541 = vpop.f32.mrb[0].mxu0
      %542 = vmatprep.mubr.bf16.mxu0 0
      %543 = vmatmul.mubr.bf16.gmra.mrb[0].mxu0 %v419
      %v544 = vpop.f32.mrb[0].mxu0
      %v545 = vadd.f32 %v282, %v544
      %v546 = vpop.f32.mrb[0].mxu0
      %v547 = vpop.f32.mrb[0].mxu0
      %v548 = vadd.f32 %v283, %v547
      %v549 = vpop.f32.mrb[0].mxu0
      %550 = vmatprep.mubr.bf16.mxu0 0
      %551 = vmatmul.mubr.bf16.gmra.mrb[0].mxu0 %v422
      %v552 = vpop.f32.mrb[0].mxu0
      %v553 = vadd.f32 %v284, %v552
      %v554 = vpop.f32.mrb[0].mxu0
      %v555 = vpop.f32.mrb[0].mxu0
      %v556 = vadd.f32 %v285, %v555
      %v557 = vpop.f32.mrb[0].mxu0
      %558 = vmatprep.mubr.bf16.mxu0 0
      %559 = vmatmul.mubr.bf16.gmra.mrb[0].mxu0 %v425
      %v560 = vpop.f32.mrb[0].mxu0
      %v561 = vadd.f32 %v286, %v560
      %v562 = vpop.f32.mrb[0].mxu0
      %v563 = vpop.f32.mrb[0].mxu0
      %v564 = vadd.f32 %v287, %v563
      %v565 = vpop.f32.mrb[0].mxu0
      %566 = vmatprep.mubr.bf16.mxu0 0
      %567 = vmatmul.mubr.bf16.gmra.mrb[0].mxu0 %v428
      %v568 = vpop.f32.mrb[0].mxu0
      %v569 = vadd.f32 %v288, %v568
      %v570 = vpop.f32.mrb[0].mxu0
      %v571 = vpop.f32.mrb[0].mxu0
      %v572 = vadd.f32 %v289, %v571
      %v573 = vpop.f32.mrb[0].mxu0
      %574 = vmatprep.mubr.bf16.mxu0 0
      %575 = vmatmul.mubr.bf16.gmra.mrb[0].mxu0 %v431
      %v576 = vpop.f32.mrb[0].mxu0
      %v577 = vadd.f32 %v290, %v576
      %v578 = vpop.f32.mrb[0].mxu0
      %v579 = vpop.f32.mrb[0].mxu0
      %v580 = vadd.f32 %v291, %v579
      %v581 = vpop.f32.mrb[0].mxu0
      %582 = vmatprep.mubr.bf16.mxu0 0
      %583 = vmatmul.mubr.bf16.gmra.mrb[0].mxu0 %v434
      %v584 = vpop.f32.mrb[0].mxu0
      %v585 = vadd.f32 %v292, %v584
      %v586 = vpop.f32.mrb[0].mxu0
      %v587 = vpop.f32.mrb[0].mxu0
      %v588 = vadd.f32 %v293, %v587
      %v589 = vpop.f32.mrb[0].mxu0
      %590 = vmatprep.mubr.bf16.mxu0 0
      %591 = vmatmul.mubr.bf16.gmra.mrb[0].mxu0 %v437
      %v592 = vpop.f32.mrb[0].mxu0
      %v593 = vadd.f32 %v294, %v592
      %v594 = vpop.f32.mrb[0].mxu0
      %v595 = vpop.f32.mrb[0].mxu0
      %v596 = vadd.f32 %v295, %v595
      %v597 = vpop.f32.mrb[0].mxu0
      %598 = vmatprep.mubr.bf16.mxu0 0
      %599 = vmatmul.mubr.bf16.gmra.mrb[0].mxu0 %v440
      %v600 = vpop.f32.mrb[0].mxu0
      %v601 = vadd.f32 %v296, %v600
      %v602 = vpop.f32.mrb[0].mxu0
      %v603 = vpop.f32.mrb[0].mxu0
      %v604 = vadd.f32 %v297, %v603
      %v605 = vpop.f32.mrb[0].mxu0
      %606 = vdwg.mxu0
      %v607 = vmul.f32 %v481, 0.2
      %v608 = vmul.f32 %v484, 0.2
      %v609 = vmul.f32 %v489, 0.2
      %v610 = vmul.f32 %v492, 0.2
      %v611 = vmul.f32 %v497, 0.2
      %v612 = vmul.f32 %v500, 0.2
      %v613 = vmul.f32 %v505, 0.2
      %v614 = vmul.f32 %v508, 0.2
      %v615 = vmul.f32 %v513, 0.2
      %v616 = vmul.f32 %v516, 0.2
      %v617 = vmul.f32 %v521, 0.2
      %v618 = vmul.f32 %v524, 0.2
      %v619 = vmul.f32 %v529, 0.2
      %v620 = vmul.f32 %v532, 0.2
      %v621 = vmul.f32 %v537, 0.2
      %v622 = vmul.f32 %v540, 0.2
      %v623 = vmul.f32 %v545, 0.2
      %v624 = vmul.f32 %v548, 0.2
      %v625 = vmul.f32 %v553, 0.2
      %v626 = vmul.f32 %v556, 0.2
      %v627 = vmul.f32 %v561, 0.2
      %v628 = vmul.f32 %v564, 0.2
      %v629 = vmul.f32 %v569, 0.2
      %v630 = vmul.f32 %v572, 0.2
      %v631 = vmul.f32 %v577, 0.2
      %v632 = vmul.f32 %v580, 0.2
      %v633 = vmul.f32 %v585, 0.2
      %v634 = vmul.f32 %v588, 0.2
      %v635 = vmul.f32 %v593, 0.2
      %v636 = vmul.f32 %v596, 0.2
      %v637 = vmul.f32 %v601, 0.2
      %v638 = vmul.f32 %v604, 0.2
      %v639 = vmax.f32 %v481, %v607
      %v640 = vmax.f32 %v484, %v608
      %v641 = vmax.f32 %v489, %v609
      %v642 = vmax.f32 %v492, %v610
      %v643 = vmax.f32 %v497, %v611
      %v644 = vmax.f32 %v500, %v612
      %v645 = vmax.f32 %v505, %v613
      %v646 = vmax.f32 %v508, %v614
      %v647 = vmax.f32 %v513, %v615
      %v648 = vmax.f32 %v516, %v616
      %v649 = vmax.f32 %v521, %v617
      %v650 = vmax.f32 %v524, %v618
      %v651 = vmax.f32 %v529, %v619
      %v652 = vmax.f32 %v532, %v620
      %v653 = vmax.f32 %v537, %v621
      %v654 = vmax.f32 %v540, %v622
      %v655 = vmax.f32 %v545, %v623
      %v656 = vmax.f32 %v548, %v624
      %v657 = vmax.f32 %v553, %v625
      %v658 = vmax.f32 %v556, %v626
      %v659 = vmax.f32 %v561, %v627
      %v660 = vmax.f32 %v564, %v628
      %v661 = vmax.f32 %v569, %v629
      %v662 = vmax.f32 %v572, %v630
      %v663 = vmax.f32 %v577, %v631
      %v664 = vmax.f32 %v580, %v632
      %v665 = vmax.f32 %v585, %v633
      %v666 = vmax.f32 %v588, %v634
      %v667 = vmax.f32 %v593, %v635
      %v668 = vmax.f32 %v596, %v636
      %v669 = vmax.f32 %v601, %v637
      %v670 = vmax.f32 %v604, %v638
      %v671 = vpack.c.bf16 %v640, %v639
      %v672 = vpack.c.bf16 %v642, %v641
      %v673 = vpack.c.bf16 %v644, %v643
      %v674 = vpack.c.bf16 %v646, %v645
      %v675 = vpack.c.bf16 %v648, %v647
      %v676 = vpack.c.bf16 %v650, %v649
      %v677 = vpack.c.bf16 %v652, %v651
      %v678 = vpack.c.bf16 %v654, %v653
      %v679 = vpack.c.bf16 %v656, %v655
      %v680 = vpack.c.bf16 %v658, %v657
      %v681 = vpack.c.bf16 %v660, %v659
      %v682 = vpack.c.bf16 %v662, %v661
      %v683 = vpack.c.bf16 %v664, %v663
      %v684 = vpack.c.bf16 %v666, %v665
      %v685 = vpack.c.bf16 %v668, %v667
      %v686 = vpack.c.bf16 %v670, %v669
      %v687 = vld [vmem:[%s3] sm:$0xf]
      %v688 = vld [vmem:[%s4] sm:$0xff]
      %v689 = vld [vmem:[%s4 + $0x8] sm:$0xff]
      %v690 = vld [vmem:[%s4 + $0x10] sm:$0xff]
      %v691 = vld [vmem:[%s4 + $0x18] sm:$0xff]
      %v692 = vld [vmem:[%s4 + $0x20] sm:$0xff]
      %v693 = vld [vmem:[%s4 + $0x28] sm:$0xff]
      %v694 = vld [vmem:[%s4 + $0x30] sm:$0xff]
      %v695 = vld [vmem:[%s4 + $0x38] sm:$0xff]
      %v696 = vld [vmem:[%s4 + $0x40] sm:$0xff]
      %v697 = vld [vmem:[%s4 + $0x48] sm:$0xff]
      %v698 = vld [vmem:[%s4 + $0x50] sm:$0xff]
      %v699 = vld [vmem:[%s4 + $0x58] sm:$0xff]
      %v700 = vld [vmem:[%s4 + $0x60] sm:$0xff]
      %v701 = vld [vmem:[%s4 + $0x68] sm:$0xff]
      %v702 = vld [vmem:[%s4 + $0x70] sm:$0xff]
      %v703 = vld [vmem:[%s4 + $0x78] sm:$0xff]
      %v704 = vld [vmem:[%s4 + $0x80] sm:$0xff]
      %v705 = vld [vmem:[%s4 + $0x88] sm:$0xff]
      %v706 = vld [vmem:[%s4 + $0x90] sm:$0xff]
      %v707 = vld [vmem:[%s4 + $0x98] sm:$0xff]
      %v708 = vld [vmem:[%s4 + $0xa0] sm:$0xff]
      %v709 = vld [vmem:[%s4 + $0xa8] sm:$0xff]
      %v710 = vld [vmem:[%s4 + $0xb0] sm:$0xff]
      %v711 = vld [vmem:[%s4 + $0xb8] sm:$0xff]
      %v712 = vld [vmem:[%s4 + $0xc0] sm:$0xff]
      %v713 = vld [vmem:[%s4 + $0xc8] sm:$0xff]
      %v714 = vld [vmem:[%s4 + $0xd0] sm:$0xff]
      %v715 = vld [vmem:[%s4 + $0xd8] sm:$0xff]
      %v716 = vld [vmem:[%s4 + $0xe0] sm:$0xff]
      %v717 = vld [vmem:[%s4 + $0xe8] sm:$0xff]
      %v718 = vld [vmem:[%s4 + $0xf0] sm:$0xff]
      %v719 = vld [vmem:[%s4 + $0xf8] sm:$0xff]
      %vm720 = vcmask 64512
      %v722 = vsel %vm720, %v671, 0
      %v725 = vsel %vm720, %v672, 0
      %v728 = vsel %vm720, %v673, 0
      %v731 = vsel %vm720, %v674, 0
      %v734 = vsel %vm720, %v675, 0
      %v737 = vsel %vm720, %v676, 0
      %v740 = vsel %vm720, %v677, 0
      %v743 = vsel %vm720, %v678, 0
      %v746 = vsel %vm720, %v679, 0
      %v749 = vsel %vm720, %v680, 0
      %v752 = vsel %vm720, %v681, 0
      %v755 = vsel %vm720, %v682, 0
      %v758 = vsel %vm720, %v683, 0
      %v761 = vsel %vm720, %v684, 0
      %v764 = vsel %vm720, %v685, 0
      %v767 = vsel %vm720, %v686, 0
      %vm769 = vcmask 1043456
      %v771 = vsel %vm769, %v687, 0
      %773 = vmatprep.subr.bf16.mxu0 0
      %774 = vmatpush1.bf16.msra.mxu0 %v771
      %775 = vmatprep.subr.bf16.mxu0 0
      %776 = vmatpush1.bf16.msra.mxu0 0
      %777 = vmatprep.subr.bf16.mxu0 0
      %778 = vmatpush1.bf16.msra.mxu0 0
      %779 = vmatprep.subr.bf16.mxu0 0
      %780 = vmatpush1.bf16.msra.mxu0 0
      %781 = vmatprep.subr.bf16.mxu0 0
      %782 = vmatpush1.bf16.msra.mxu0 0
      %783 = vmatprep.subr.bf16.mxu0 0
      %784 = vmatpush1.bf16.msra.mxu0 0
      %785 = vmatprep.subr.bf16.mxu0 0
      %786 = vmatpush1.bf16.msra.mxu0 0
      %787 = vmatprep.subr.bf16.mxu0 0
      %788 = vmatpush1.bf16.msra.mxu0 0
      %789 = vmatprep.subr.bf16.mxu0 0
      %790 = vmatpush1.bf16.msra.mxu0 0
      %791 = vmatprep.subr.bf16.mxu0 0
      %792 = vmatpush1.bf16.msra.mxu0 0
      %793 = vmatprep.subr.bf16.mxu0 0
      %794 = vmatpush1.bf16.msra.mxu0 0
      %795 = vmatprep.subr.bf16.mxu0 0
      %796 = vmatpush1.bf16.msra.mxu0 0
      %797 = vmatprep.subr.bf16.mxu0 0
      %798 = vmatpush1.bf16.msra.mxu0 0
      %799 = vmatprep.subr.bf16.mxu0 0
      %800 = vmatpush1.bf16.msra.mxu0 0
      %801 = vmatprep.subr.bf16.mxu0 0
      %802 = vmatpush1.bf16.msra.mxu0 0
      %803 = vmatprep.subr.bf16.mxu0 0
      %804 = vmatpush1.bf16.msra.mxu0 0
      %805 = vmatprep.mubr.bf16.mxu0 0
      %806 = vmatmul.mubr.bf16.gmra.mrb[0].mxu0 %v722
      %v807 = vpop.f32.mrb[0].mxu0
      %v808 = vadd.f32 %v688, %v807
      %v809 = vpop.f32.mrb[0].mxu0
      %v810 = vpop.f32.mrb[0].mxu0
      %v811 = vadd.f32 %v689, %v810
      %v812 = vpop.f32.mrb[0].mxu0
      %813 = vmatprep.mubr.bf16.mxu0 0
      %814 = vmatmul.mubr.bf16.gmra.mrb[0].mxu0 %v725
      %v815 = vpop.f32.mrb[0].mxu0
      %v816 = vadd.f32 %v690, %v815
      %v817 = vpop.f32.mrb[0].mxu0
      %v818 = vpop.f32.mrb[0].mxu0
      %v819 = vadd.f32 %v691, %v818
      %v820 = vpop.f32.mrb[0].mxu0
      %821 = vmatprep.mubr.bf16.mxu0 0
      %822 = vmatmul.mubr.bf16.gmra.mrb[0].mxu0 %v728
      %v823 = vpop.f32.mrb[0].mxu0
      %v824 = vadd.f32 %v692, %v823
      %v825 = vpop.f32.mrb[0].mxu0
      %v826 = vpop.f32.mrb[0].mxu0
      %v827 = vadd.f32 %v693, %v826
      %v828 = vpop.f32.mrb[0].mxu0
      %829 = vmatprep.mubr.bf16.mxu0 0
      %830 = vmatmul.mubr.bf16.gmra.mrb[0].mxu0 %v731
      %v831 = vpop.f32.mrb[0].mxu0
      %v832 = vadd.f32 %v694, %v831
      %v833 = vpop.f32.mrb[0].mxu0
      %v834 = vpop.f32.mrb[0].mxu0
      %v835 = vadd.f32 %v695, %v834
      %v836 = vpop.f32.mrb[0].mxu0
      %837 = vmatprep.mubr.bf16.mxu0 0
      %838 = vmatmul.mubr.bf16.gmra.mrb[0].mxu0 %v734
      %v839 = vpop.f32.mrb[0].mxu0
      %v840 = vadd.f32 %v696, %v839
      %v841 = vpop.f32.mrb[0].mxu0
      %v842 = vpop.f32.mrb[0].mxu0
      %v843 = vadd.f32 %v697, %v842
      %v844 = vpop.f32.mrb[0].mxu0
      %845 = vmatprep.mubr.bf16.mxu0 0
      %846 = vmatmul.mubr.bf16.gmra.mrb[0].mxu0 %v737
      %v847 = vpop.f32.mrb[0].mxu0
      %v848 = vadd.f32 %v698, %v847
      %v849 = vpop.f32.mrb[0].mxu0
      %v850 = vpop.f32.mrb[0].mxu0
      %v851 = vadd.f32 %v699, %v850
      %v852 = vpop.f32.mrb[0].mxu0
      %853 = vmatprep.mubr.bf16.mxu0 0
      %854 = vmatmul.mubr.bf16.gmra.mrb[0].mxu0 %v740
      %v855 = vpop.f32.mrb[0].mxu0
      %v856 = vadd.f32 %v700, %v855
      %v857 = vpop.f32.mrb[0].mxu0
      %v858 = vpop.f32.mrb[0].mxu0
      %v859 = vadd.f32 %v701, %v858
      %v860 = vpop.f32.mrb[0].mxu0
      %861 = vmatprep.mubr.bf16.mxu0 0
      %862 = vmatmul.mubr.bf16.gmra.mrb[0].mxu0 %v743
      %v863 = vpop.f32.mrb[0].mxu0
      %v864 = vadd.f32 %v702, %v863
      %v865 = vpop.f32.mrb[0].mxu0
      %v866 = vpop.f32.mrb[0].mxu0
      %v867 = vadd.f32 %v703, %v866
      %v868 = vpop.f32.mrb[0].mxu0
      %869 = vmatprep.mubr.bf16.mxu0 0
      %870 = vmatmul.mubr.bf16.gmra.mrb[0].mxu0 %v746
      %v871 = vpop.f32.mrb[0].mxu0
      %v872 = vadd.f32 %v704, %v871
      %v873 = vpop.f32.mrb[0].mxu0
      %v874 = vpop.f32.mrb[0].mxu0
      %v875 = vadd.f32 %v705, %v874
      %v876 = vpop.f32.mrb[0].mxu0
      %877 = vmatprep.mubr.bf16.mxu0 0
      %878 = vmatmul.mubr.bf16.gmra.mrb[0].mxu0 %v749
      %v879 = vpop.f32.mrb[0].mxu0
      %v880 = vadd.f32 %v706, %v879
      %v881 = vpop.f32.mrb[0].mxu0
      %v882 = vpop.f32.mrb[0].mxu0
      %v883 = vadd.f32 %v707, %v882
      %v884 = vpop.f32.mrb[0].mxu0
      %885 = vmatprep.mubr.bf16.mxu0 0
      %886 = vmatmul.mubr.bf16.gmra.mrb[0].mxu0 %v752
      %v887 = vpop.f32.mrb[0].mxu0
      %v888 = vadd.f32 %v708, %v887
      %v889 = vpop.f32.mrb[0].mxu0
      %v890 = vpop.f32.mrb[0].mxu0
      %v891 = vadd.f32 %v709, %v890
      %v892 = vpop.f32.mrb[0].mxu0
      %893 = vmatprep.mubr.bf16.mxu0 0
      %894 = vmatmul.mubr.bf16.gmra.mrb[0].mxu0 %v755
      %v895 = vpop.f32.mrb[0].mxu0
      %v896 = vadd.f32 %v710, %v895
      %v897 = vpop.f32.mrb[0].mxu0
      %v898 = vpop.f32.mrb[0].mxu0
      %v899 = vadd.f32 %v711, %v898
      %v900 = vpop.f32.mrb[0].mxu0
      %901 = vmatprep.mubr.bf16.mxu0 0
      %902 = vmatmul.mubr.bf16.gmra.mrb[0].mxu0 %v758
      %v903 = vpop.f32.mrb[0].mxu0
      %v904 = vadd.f32 %v712, %v903
      %v905 = vpop.f32.mrb[0].mxu0
      %v906 = vpop.f32.mrb[0].mxu0
      %v907 = vadd.f32 %v713, %v906
      %v908 = vpop.f32.mrb[0].mxu0
      %909 = vmatprep.mubr.bf16.mxu0 0
      %910 = vmatmul.mubr.bf16.gmra.mrb[0].mxu0 %v761
      %v911 = vpop.f32.mrb[0].mxu0
      %v912 = vadd.f32 %v714, %v911
      %v913 = vpop.f32.mrb[0].mxu0
      %v914 = vpop.f32.mrb[0].mxu0
      %v915 = vadd.f32 %v715, %v914
      %v916 = vpop.f32.mrb[0].mxu0
      %917 = vmatprep.mubr.bf16.mxu0 0
      %918 = vmatmul.mubr.bf16.gmra.mrb[0].mxu0 %v764
      %v919 = vpop.f32.mrb[0].mxu0
      %v920 = vadd.f32 %v716, %v919
      %v921 = vpop.f32.mrb[0].mxu0
      %v922 = vpop.f32.mrb[0].mxu0
      %v923 = vadd.f32 %v717, %v922
      %v924 = vpop.f32.mrb[0].mxu0
      %925 = vmatprep.mubr.bf16.mxu0 0
      %926 = vmatmul.mubr.bf16.gmra.mrb[0].mxu0 %v767
      %v927 = vpop.f32.mrb[0].mxu0
      %v928 = vadd.f32 %v718, %v927
      %v929 = vpop.f32.mrb[0].mxu0
      %v930 = vpop.f32.mrb[0].mxu0
      %v931 = vadd.f32 %v719, %v930
      %v932 = vpop.f32.mrb[0].mxu0
      %933 = vdwg.mxu0
      %vm934 = vcmask 97280
      %935 = vst.msk [vmem:[%s226] sm:$0xff] %vm934, %v808
      %936 = vst.msk [vmem:[%s226 + $0x8] sm:$0xff] %vm934, %v811
      %937 = vst.msk [vmem:[%s226 + $0x10] sm:$0xff] %vm934, %v816
      %938 = vst.msk [vmem:[%s226 + $0x18] sm:$0xff] %vm934, %v819
      %939 = vst.msk [vmem:[%s226 + $0x20] sm:$0xff] %vm934, %v824
      %940 = vst.msk [vmem:[%s226 + $0x28] sm:$0xff] %vm934, %v827
      %941 = vst.msk [vmem:[%s226 + $0x30] sm:$0xff] %vm934, %v832
      %942 = vst.msk [vmem:[%s226 + $0x38] sm:$0xff] %vm934, %v835
      %943 = vst.msk [vmem:[%s226 + $0x40] sm:$0xff] %vm934, %v840
      %944 = vst.msk [vmem:[%s226 + $0x48] sm:$0xff] %vm934, %v843
      %945 = vst.msk [vmem:[%s226 + $0x50] sm:$0xff] %vm934, %v848
      %946 = vst.msk [vmem:[%s226 + $0x58] sm:$0xff] %vm934, %v851
      %947 = vst.msk [vmem:[%s226 + $0x60] sm:$0xff] %vm934, %v856
      %948 = vst.msk [vmem:[%s226 + $0x68] sm:$0xff] %vm934, %v859
      %949 = vst.msk [vmem:[%s226 + $0x70] sm:$0xff] %vm934, %v864
      %950 = vst.msk [vmem:[%s226 + $0x78] sm:$0xff] %vm934, %v867
      %951 = vst.msk [vmem:[%s226 + $0x80] sm:$0xff] %vm934, %v872
      %952 = vst.msk [vmem:[%s226 + $0x88] sm:$0xff] %vm934, %v875
      %953 = vst.msk [vmem:[%s226 + $0x90] sm:$0xff] %vm934, %v880
      %954 = vst.msk [vmem:[%s226 + $0x98] sm:$0xff] %vm934, %v883
      %955 = vst.msk [vmem:[%s226 + $0xa0] sm:$0xff] %vm934, %v888
      %956 = vst.msk [vmem:[%s226 + $0xa8] sm:$0xff] %vm934, %v891
      %957 = vst.msk [vmem:[%s226 + $0xb0] sm:$0xff] %vm934, %v896
      %958 = vst.msk [vmem:[%s226 + $0xb8] sm:$0xff] %vm934, %v899
      %959 = vst.msk [vmem:[%s226 + $0xc0] sm:$0xff] %vm934, %v904
      %960 = vst.msk [vmem:[%s226 + $0xc8] sm:$0xff] %vm934, %v907
      %961 = vst.msk [vmem:[%s226 + $0xd0] sm:$0xff] %vm934, %v912
      %962 = vst.msk [vmem:[%s226 + $0xd8] sm:$0xff] %vm934, %v915
      %963 = vst.msk [vmem:[%s226 + $0xe0] sm:$0xff] %vm934, %v920
      %964 = vst.msk [vmem:[%s226 + $0xe8] sm:$0xff] %vm934, %v923
      %965 = vst.msk [vmem:[%s226 + $0xf0] sm:$0xff] %vm934, %v928
      %966 = vst.msk [vmem:[%s226 + $0xf8] sm:$0xff] %vm934, %v931
      %s967 = smul.u32 32, %s16
      %p968 = scmp.lt.s32.totalorder %s967, 63
      %s969 = scalar_select %p968, %s967, 63
      %s970 = smul.addr %s969, 8
      %s971 = scalar_lea.vmem %s5, %s970
      // Predicated region
      $region41: #{tpu_custom_call.1} parent=39 // pred_check
        %p972 = pneg %p144
      $region42: #{tpu_custom_call.1} parent=39 // pred_check_branch
        %974 = sbr.rel (%p972) target = $region44
      $region43: #{tpu_custom_call.1} parent=39 // pred_region
        %s975 = smul.u32 32, %s16
      $region44: #{tpu_custom_call.1} parent=39 // pred_fallthru
        _
    $region40: #{tpu_custom_call.1} parent=5 // pred_fallthru
      _
    %p976 = scmp.le.s32.totalorder 2, %s11
    // Predicated region
    $region45: #{tpu_custom_call.1} parent=5 // pred_check
      %p977 = pneg %p976
    $region46: #{tpu_custom_call.1} parent=5 // pred_check_branch
      %979 = sbr.rel (%p977) target = $region48
    $region47: #{tpu_custom_call.1} parent=5 // pred_region
      %s980 = ssub.s32 %s11, 2
      // Predicated region
      $region49: #{tpu_custom_call.1} parent=47 // pred_check
        %p981 = pneg %p150
      $region50: #{tpu_custom_call.1} parent=47 // pred_check_branch
        %983 = sbr.rel (%p981) target = $region52
      $region51: #{tpu_custom_call.1} parent=47 // pred_region
        %s984 = smul.u32 32, %s17
        %p985 = scmp.lt.s32.totalorder %s984, 63
        %s986 = scalar_select %p985, %s984, 63
        %s987 = smul.addr %s986, 8
        %s988 = scalar_lea.vmem %s5, %s987
      $region52: #{tpu_custom_call.1} parent=47 // pred_fallthru
        _
    $region48: #{tpu_custom_call.1} parent=5 // pred_fallthru
      _
  $region6: #{tpu_custom_call.1} parent=0 // loop_footer
    %s15 = sadd.s32 1, %s11
  $region7: #{tpu_custom_call.1} parent=0 // loop_footer_branch
    %10 = sbr.rel target = $region3
  $region8: #{tpu_custom_call.1} parent=0 // loop_exit
    _

</llo_original>
